<compile_context>
chip_gen: v5e
topology: v5e:2x2
jax: 0.10.0
libtpu: 0.0.40
codegen_flags: <defaults>
</compile_context>

<pallas_src>
import functools

import jax
import jax.numpy as jnp
from jax.experimental import pallas as pl
from jax.experimental.pallas import tpu as pltpu


# ----------------------------- kernels ---------------------------------------


def qkv_proj_kernel(x_ref, wq_ref, wk_ref, wv_ref, bq_ref, bk_ref, bv_ref,
                    q_ref, k_ref, v_ref):
    # x_ref: (1, tm, d_model) f32 ; w*_ref: (d_model, H*D) bf16 ; b*_ref: (1, H*D) f32
    # outputs: q/k/v (1, tm, H*D) bf16, already in the attention-friendly packed layout.
    x = x_ref[0].astype(jnp.bfloat16)
    q = jnp.dot(x, wq_ref[...], preferred_element_type=jnp.float32) + bq_ref[...]
    k = jnp.dot(x, wk_ref[...], preferred_element_type=jnp.float32) + bk_ref[...]
    v = jnp.dot(x, wv_ref[...], preferred_element_type=jnp.float32) + bv_ref[...]
    q_ref[0] = q.astype(q_ref.dtype)
    k_ref[0] = k.astype(k_ref.dtype)
    v_ref[0] = v.astype(v_ref.dtype)


def flash_attn_kernel(q_ref, k_ref, v_ref, o_ref, m_sc, l_sc, acc_sc, *,
                      n_head, d_head):
    # q_ref: (1, tq, H*D) bf16 ; k_ref/v_ref: (1, tk, H*D) bf16 ; o_ref: (1, tq, H*D) bf16
    # scratch (lives across the KV axis): m_sc/l_sc (H, tq, 1) f32, acc_sc (H, tq, D) f32.
    # NOTE: the 1/sqrt(D) scale is already folded into the Q projection weights.
    H, D = n_head, d_head
    ki = pl.program_id(2)

    @pl.when(ki == 0)
    def _init():
        m_sc[...] = jnp.full_like(m_sc, -jnp.inf)
        l_sc[...] = jnp.zeros_like(l_sc)
        acc_sc[...] = jnp.zeros_like(acc_sc)

    q_all = q_ref[0]          # (tq, H*D) bf16, single dense load
    k_all = k_ref[0]          # (tk, H*D)
    v_all = v_ref[0]          # (tk, H*D)

    for h in range(H):        # static unroll over heads (compile-time column slices)
        q = q_all[:, h * D:(h + 1) * D]            # (tq, D)
        k = k_all[:, h * D:(h + 1) * D]            # (tk, D)
        v = v_all[:, h * D:(h + 1) * D]            # (tk, D)

        # Scores: contract over D without an explicit transpose of k.
        s = jax.lax.dot_general(q, k, (((1,), (1,)), ((), ())),
                                preferred_element_type=jnp.float32)   # (tq, tk) f32

        m_prev = m_sc[h]                                               # (tq, 1)
        m_new = jnp.maximum(m_prev, jnp.max(s, axis=-1, keepdims=True))
        alpha = jnp.exp(m_prev - m_new)
        p = jnp.exp(s - m_new)                                         # (tq, tk) f32
        l_sc[h] = alpha * l_sc[h] + jnp.sum(p, axis=-1, keepdims=True)
        m_sc[h] = m_new

        pv = jax.lax.dot_general(p.astype(v.dtype), v, (((1,), (0,)), ((), ())),
                                 preferred_element_type=jnp.float32)  # (tq, D) f32
        acc_sc[h] = alpha * acc_sc[h] + pv

    @pl.when(ki == pl.num_programs(2) - 1)
    def _finalize():
        # Normalize once after all PV matmuls; assemble all heads into a single
        # lane-dense (tq, H*D) store ( == flash-attn's (B, T, H, D) buffer layout ).
        outs = [acc_sc[h] * pl.reciprocal(l_sc[h], approx=True) for h in range(H)]
        o_ref[0] = jnp.concatenate(outs, axis=-1).astype(o_ref.dtype)


def out_proj_ln_kernel(a_ref, res_ref, wo_ref, g_ref, bt_ref, o_ref, *, eps):
    # a_ref: (1, tm, H*D) bf16 ; res_ref: (1, tm, d_model) f32 ; wo_ref: (H*D, d_model) bf16
    y = jnp.dot(a_ref[0], wo_ref[...], preferred_element_type=jnp.float32)
    z = res_ref[0] + y                                 # dropout is identity at inference
    mu = jnp.mean(z, axis=-1, keepdims=True)
    var = jnp.mean(jnp.square(z - mu), axis=-1, keepdims=True)
    zn = (z - mu) * jax.lax.rsqrt(var + eps)
    o_ref[0] = (zn * g_ref[...] + bt_ref[...]).astype(o_ref.dtype)


# ----------------------------- wrapper ----------------------------------------


def _pick_tile(n, pref):
    """Largest sublane-aligned tile <= pref that divides n; falls back to n (full dim)."""
    if n <= pref:
        return n
    for t in range(pref, 8, -8):
        if n % t == 0:
            return t
    return n


def multi_head_attn_flash(x, w_qkv, b_qkv, w_o, gamma, beta, *, n_head, d_head,
                          eps=1e-5, q_tile=256, kv_tile=256, seq_tile=256):
    # q_tile/kv_tile = 256 is sized for v7x's 64 MiB VMEM and matches the 256x256 MXU;
    # on v6e/v5e (128 MiB VMEM) 512 is a good setting for large T.
    B, T, d_model = x.shape
    H, D = n_head, d_head
    HD = H * D
    scale = 1.0 / (d_head ** 0.5)
    f32, bf16 = jnp.float32, jnp.bfloat16

    tq = _pick_tile(T, q_tile)
    tk = _pick_tile(T, kv_tile)
    tm = _pick_tile(T, seq_tile)
    nq, nk, nt = T // tq, T // tk, T // tm

    # Parameter prep: split the packed qkv weight, fold the softmax scale into the Q
    # projection (free), and cast all MXU operands to bf16 (accumulation stays f32).
    wq = (w_qkv[:, :HD] * scale).astype(bf16)
    wk = w_qkv[:, HD:2 * HD].astype(bf16)
    wv = w_qkv[:, 2 * HD:].astype(bf16)
    bq = (b_qkv[:HD] * scale).reshape(1, HD).astype(f32)
    bk = b_qkv[HD:2 * HD].reshape(1, HD).astype(f32)
    bv = b_qkv[2 * HD:].reshape(1, HD).astype(f32)
    wo = w_o.astype(bf16)
    g2 = gamma.reshape(1, d_model).astype(f32)
    b2 = beta.reshape(1, d_model).astype(f32)

    # --- 1) QKV projection: emits q/k/v already in the (B, T, H*D) attention layout ---
    w_spec = pl.BlockSpec((d_model, HD), lambda b, t: (0, 0))
    b_spec = pl.BlockSpec((1, HD), lambda b, t: (0, 0))
    qkv_out_spec = pl.BlockSpec((1, tm, HD), lambda b, t: (b, t, 0))
    q, k, v = pl.pallas_call(
        qkv_proj_kernel,
        out_shape=(jax.ShapeDtypeStruct((B, T, HD), bf16),
                   jax.ShapeDtypeStruct((B, T, HD), bf16),
                   jax.ShapeDtypeStruct((B, T, HD), bf16)),
        grid=(B, nt),
        in_specs=[
            pl.BlockSpec((1, tm, d_model), lambda b, t: (b, t, 0)),
            w_spec, w_spec, w_spec, b_spec, b_spec, b_spec,
        ],
        out_specs=(qkv_out_spec, qkv_out_spec, qkv_out_spec),
        compiler_params=pltpu.CompilerParams(
            dimension_semantics=("parallel", "parallel")),
        cost_estimate=pl.CostEstimate(
            flops=2 * B * T * d_model * 3 * HD,
            transcendentals=0,
            bytes_accessed=4 * B * T * d_model + 2 * 3 * d_model * HD + 2 * 3 * B * T * HD),
    )(x, wq, wk, wv, bq, bk, bv)

    # --- 2) Flash attention: grid (B, q-tiles, kv-tiles), online softmax in VMEM scratch ---
    attn = pl.pallas_call(
        functools.partial(flash_attn_kernel, n_head=H, d_head=D),
        out_shape=jax.ShapeDtypeStruct((B, T, HD), bf16),
        grid_spec=pltpu.PrefetchScalarGridSpec(
            num_scalar_prefetch=0,
            grid=(B, nq, nk),
            in_specs=[
                pl.BlockSpec((1, tq, HD), lambda b, qi, ki: (b, qi, 0)),
                pl.BlockSpec((1, tk, HD), lambda b, qi, ki: (b, ki, 0)),
                pl.BlockSpec((1, tk, HD), lambda b, qi, ki: (b, ki, 0)),
            ],
            out_specs=pl.BlockSpec((1, tq, HD), lambda b, qi, ki: (b, qi, 0)),
            scratch_shapes=[
                pltpu.VMEM((H, tq, 1), f32),    # running max  m
                pltpu.VMEM((H, tq, 1), f32),    # running sum  l
                pltpu.VMEM((H, tq, D), f32),    # running acc
            ]),
        compiler_params=pltpu.CompilerParams(
            dimension_semantics=("parallel", "parallel", "arbitrary"),
            vmem_limit_bytes=48 * 1024 * 1024),
        cost_estimate=pl.CostEstimate(
            flops=4 * B * H * T * T * D,
            transcendentals=B * H * T * T,
            bytes_accessed=2 * 3 * B * T * HD + 2 * B * T * HD),
    )(q, k, v)

    # --- module's exact attn_vec reinterpretation ---
    # flash output (B,T,H,D) buffer -> .view(H,B,T,D).permute(1,2,0,3).view(B,T,H*D).
    # For B>1, H>1 this scrambles data across batch/head exactly like the PyTorch code does;
    # it is an irregular cross-batch gather, so it stays as XLA layout glue on the bf16 tensor.
    attn_vec = attn.reshape(H, B, T, D)
    attn_vec = jnp.transpose(attn_vec, (1, 2, 0, 3)).reshape(B, T, HD)

    # --- 3) output projection + residual + LayerNorm (fused, seq-tiled) ---
    out = pl.pallas_call(
        functools.partial(out_proj_ln_kernel, eps=eps),
        out_shape=jax.ShapeDtypeStruct((B, T, d_model), x.dtype),
        grid=(B, nt),
        in_specs=[
            pl.BlockSpec((1, tm, HD), lambda b, t: (b, t, 0)),
            pl.BlockSpec((1, tm, d_model), lambda b, t: (b, t, 0)),
            pl.BlockSpec((HD, d_model), lambda b, t: (0, 0)),
            pl.BlockSpec((1, d_model), lambda b, t: (0, 0)),
            pl.BlockSpec((1, d_model), lambda b, t: (0, 0)),
        ],
        out_specs=pl.BlockSpec((1, tm, d_model), lambda b, t: (b, t, 0)),
        compiler_params=pltpu.CompilerParams(
            dimension_semantics=("parallel", "parallel")),
        cost_estimate=pl.CostEstimate(
            flops=2 * B * T * HD * d_model,
            transcendentals=0,
            bytes_accessed=2 * B * T * HD + 2 * HD * d_model + 8 * B * T * d_model),
    )(attn_vec, x, wo, g2, b2)

    return out


# ----------------------------- reference (pure JAX, f32) -----------------------


def _reference_forward(x, w_qkv, b_qkv, w_o, gamma, beta, n_head, d_head, eps=1e-5):
    B, T, _ = x.shape
    H, D = n_head, d_head
    qkv = x @ w_qkv + b_qkv
    qkv = qkv.reshape(B, T, 3, H, D)
    q = jnp.transpose(qkv[:, :, 0], (0, 2, 1, 3))
    k = jnp.transpose(qkv[:, :, 1], (0, 2, 1, 3))
    v = jnp.transpose(qkv[:, :, 2], (0, 2, 1, 3))
    s = jnp.einsum("bhqd,bhkd->bhqk", q, k) / (D ** 0.5)
    p = jax.nn.softmax(s, axis=-1)
    o = jnp.einsum("bhqk,bhkd->bhqd", p, v)
    o = jnp.transpose(o, (0, 2, 1, 3))                      # flash output layout (B,T,H,D)
    av = o.reshape(H, B, T, D)                              # module's buggy .view reinterpretation
    av = jnp.transpose(av, (1, 2, 0, 3)).reshape(B, T, H * D)
    y = av @ w_o
    z = x + y
    mu = z.mean(-1, keepdims=True)
    var = ((z - mu) ** 2).mean(-1, keepdims=True)
    return (z - mu) / jnp.sqrt(var + eps) * gamma + beta


# ----------------------------- main -------------------------------------------

if __name__ == "__main__":
    B, T = 2, 8
    d_model, n_head, d_head = 32, 2, 16   # n_head * d_head == d_model

    key = jax.random.PRNGKey(0)
    k_x, k_wqkv, k_bqkv, k_wo = jax.random.split(key, 4)

    x = jax.random.normal(k_x, (B, T, d_model), jnp.float32)
    # qkv_net: Linear(d_model, 3*H*D) stored as (in, out); o_net: Linear(H*D, d_model, bias=False)
    w_qkv = jax.random.normal(k_wqkv, (d_model, 3 * n_head * d_head), jnp.float32) * 0.05
    b_qkv = jax.random.normal(k_bqkv, (3 * n_head * d_head,), jnp.float32) * 0.01
    w_o = jax.random.normal(k_wo, (n_head * d_head, d_model), jnp.float32) * 0.05
    gamma = jnp.ones((d_model,), jnp.float32)
    beta = jnp.zeros((d_model,), jnp.float32)

    out = multi_head_attn_flash(
        x, w_qkv, b_qkv, w_o, gamma, beta, n_head=n_head, d_head=d_head)
    jax.block_until_ready(out)
    assert out.shape == (B, T, d_model)
    assert bool(jnp.all(jnp.isfinite(out)))

    # loose tolerance: kernel uses bf16 MXU operands / approx reciprocal, reference is pure f32
    ref = _reference_forward(x, w_qkv, b_qkv, w_o, gamma, beta, n_head, d_head)
    max_err = float(jnp.max(jnp.abs(out - ref)))
    assert max_err < 1e-1, f"numerical mismatch vs reference: {max_err}"

    print("KERNEL_OK")
</pallas_src>

<mosaic_0001>
module attributes {stable_mosaic.version = 11 : i64} {
  func.func @qkv_proj_kernel(%arg0: i32, %arg1: i32, %arg2: memref<1x8x32xf32, #tpu.memory_space<vmem>>, %arg3: memref<32x32xbf16, #tpu.memory_space<vmem>>, %arg4: memref<32x32xbf16, #tpu.memory_space<vmem>>, %arg5: memref<32x32xbf16, #tpu.memory_space<vmem>>, %arg6: memref<1x32xf32, #tpu.memory_space<vmem>>, %arg7: memref<1x32xf32, #tpu.memory_space<vmem>>, %arg8: memref<1x32xf32, #tpu.memory_space<vmem>>, %arg9: memref<1x8x32xbf16, #tpu.memory_space<vmem>>, %arg10: memref<1x8x32xbf16, #tpu.memory_space<vmem>>, %arg11: memref<1x8x32xbf16, #tpu.memory_space<vmem>>) attributes {dimension_semantics = [#tpu.dimension_semantics<parallel>, #tpu.dimension_semantics<parallel>], iteration_bounds = array<i64: 2, 1>, scalar_prefetch = 0 : i64, scratch_operands = 0 : i64, tpu.core_type = #tpu.core_type<tc>, window_params = [{transform_indices = @transform_0, window_bounds = array<i64: 1, 8, 32>}, {pipeline_mode = #tpu.pipeline_mode<synchronous>, transform_indices = @transform_1, window_bounds = array<i64: 32, 32>}, {pipeline_mode = #tpu.pipeline_mode<synchronous>, transform_indices = @transform_2, window_bounds = array<i64: 32, 32>}, {pipeline_mode = #tpu.pipeline_mode<synchronous>, transform_indices = @transform_3, window_bounds = array<i64: 32, 32>}, {pipeline_mode = #tpu.pipeline_mode<synchronous>, transform_indices = @transform_4, window_bounds = array<i64: 1, 32>}, {pipeline_mode = #tpu.pipeline_mode<synchronous>, transform_indices = @transform_5, window_bounds = array<i64: 1, 32>}, {pipeline_mode = #tpu.pipeline_mode<synchronous>, transform_indices = @transform_6, window_bounds = array<i64: 1, 32>}, {transform_indices = @transform_7, window_bounds = array<i64: 1, 8, 32>}, {transform_indices = @transform_8, window_bounds = array<i64: 1, 8, 32>}, {transform_indices = @transform_9, window_bounds = array<i64: 1, 8, 32>}]} {
    %c0 = arith.constant 0 : index
    %c0_0 = arith.constant 0 : index
    %c0_1 = arith.constant 0 : index
    %0 = vector.load %arg2[%c0, %c0_0, %c0_1] : memref<1x8x32xf32, #tpu.memory_space<vmem>>, vector<1x8x32xf32>
    %1 = vector.shape_cast %0 : vector<1x8x32xf32> to vector<8x32xf32>
    %2 = arith.truncf %1 : vector<8x32xf32> to vector<8x32xbf16>
    %c0_2 = arith.constant 0 : index
    %c0_3 = arith.constant 0 : index
    %3 = vector.load %arg3[%c0_2, %c0_3] : memref<32x32xbf16, #tpu.memory_space<vmem>>, vector<32x32xbf16>
    %cst = arith.constant dense<0.000000e+00> : vector<8x32xf32>
    %4 = tpu.matmul %2, %3, %cst {dimension_numbers = #tpu.dot_dimension_numbers<[1], [0], [0], [1], [0, 0, 1, 1], [], []>} : vector<8x32xbf16>, vector<32x32xbf16>, vector<8x32xf32> -> vector<8x32xf32>
    %c0_4 = arith.constant 0 : index
    %c0_5 = arith.constant 0 : index
    %5 = vector.load %arg6[%c0_4, %c0_5] : memref<1x32xf32, #tpu.memory_space<vmem>>, vector<1x32xf32>
    %6 = vector.broadcast %5 : vector<1x32xf32> to vector<8x32xf32>
    %7 = arith.addf %4, %6 : vector<8x32xf32>
    %c0_6 = arith.constant 0 : index
    %c0_7 = arith.constant 0 : index
    %8 = vector.load %arg4[%c0_6, %c0_7] : memref<32x32xbf16, #tpu.memory_space<vmem>>, vector<32x32xbf16>
    %cst_8 = arith.constant dense<0.000000e+00> : vector<8x32xf32>
    %9 = tpu.matmul %2, %8, %cst_8 {dimension_numbers = #tpu.dot_dimension_numbers<[1], [0], [0], [1], [0, 0, 1, 1], [], []>} : vector<8x32xbf16>, vector<32x32xbf16>, vector<8x32xf32> -> vector<8x32xf32>
    %c0_9 = arith.constant 0 : index
    %c0_10 = arith.constant 0 : index
    %10 = vector.load %arg7[%c0_9, %c0_10] : memref<1x32xf32, #tpu.memory_space<vmem>>, vector<1x32xf32>
    %11 = vector.broadcast %10 : vector<1x32xf32> to vector<8x32xf32>
    %12 = arith.addf %9, %11 : vector<8x32xf32>
    %c0_11 = arith.constant 0 : index
    %c0_12 = arith.constant 0 : index
    %13 = vector.load %arg5[%c0_11, %c0_12] : memref<32x32xbf16, #tpu.memory_space<vmem>>, vector<32x32xbf16>
    %cst_13 = arith.constant dense<0.000000e+00> : vector<8x32xf32>
    %14 = tpu.matmul %2, %13, %cst_13 {dimension_numbers = #tpu.dot_dimension_numbers<[1], [0], [0], [1], [0, 0, 1, 1], [], []>} : vector<8x32xbf16>, vector<32x32xbf16>, vector<8x32xf32> -> vector<8x32xf32>
    %c0_14 = arith.constant 0 : index
    %c0_15 = arith.constant 0 : index
    %15 = vector.load %arg8[%c0_14, %c0_15] : memref<1x32xf32, #tpu.memory_space<vmem>>, vector<1x32xf32>
    %16 = vector.broadcast %15 : vector<1x32xf32> to vector<8x32xf32>
    %17 = arith.addf %14, %16 : vector<8x32xf32>
    %18 = arith.truncf %7 : vector<8x32xf32> to vector<8x32xbf16>
    %c0_16 = arith.constant 0 : index
    %c0_17 = arith.constant 0 : index
    %c0_18 = arith.constant 0 : index
    %19 = vector.load %arg9[%c0_16, %c0_17, %c0_18] : memref<1x8x32xbf16, #tpu.memory_space<vmem>>, vector<1x8x32xbf16>
    %20 = vector.shape_cast %19 : vector<1x8x32xbf16> to vector<8x32xbf16>
    %21 = vector.shape_cast %18 : vector<8x32xbf16> to vector<1x8x32xbf16>
    tpu.vector_store %arg9[%c0_16, %c0_17, %c0_18], %21 {strides = array<i32>} : memref<1x8x32xbf16, #tpu.memory_space<vmem>>, vector<1x8x32xbf16>,
    %22 = arith.truncf %12 : vector<8x32xf32> to vector<8x32xbf16>
    %c0_19 = arith.constant 0 : index
    %c0_20 = arith.constant 0 : index
    %c0_21 = arith.constant 0 : index
    %23 = vector.load %arg10[%c0_19, %c0_20, %c0_21] : memref<1x8x32xbf16, #tpu.memory_space<vmem>>, vector<1x8x32xbf16>
    %24 = vector.shape_cast %23 : vector<1x8x32xbf16> to vector<8x32xbf16>
    %25 = vector.shape_cast %22 : vector<8x32xbf16> to vector<1x8x32xbf16>
    tpu.vector_store %arg10[%c0_19, %c0_20, %c0_21], %25 {strides = array<i32>} : memref<1x8x32xbf16, #tpu.memory_space<vmem>>, vector<1x8x32xbf16>,
    %26 = arith.truncf %17 : vector<8x32xf32> to vector<8x32xbf16>
    %c0_22 = arith.constant 0 : index
    %c0_23 = arith.constant 0 : index
    %c0_24 = arith.constant 0 : index
    %27 = vector.load %arg11[%c0_22, %c0_23, %c0_24] : memref<1x8x32xbf16, #tpu.memory_space<vmem>>, vector<1x8x32xbf16>
    %28 = vector.shape_cast %27 : vector<1x8x32xbf16> to vector<8x32xbf16>
    %29 = vector.shape_cast %26 : vector<8x32xbf16> to vector<1x8x32xbf16>
    tpu.vector_store %arg11[%c0_22, %c0_23, %c0_24], %29 {strides = array<i32>} : memref<1x8x32xbf16, #tpu.memory_space<vmem>>, vector<1x8x32xbf16>,
    return
  }
  func.func @transform_0(%arg0: i32, %arg1: i32) -> (i32, i32, i32) {
    %c0_i32 = arith.constant 0 : i32
    %c0_i32_0 = arith.constant 0 : i32
    return %arg0, %arg1, %c0_i32 : i32, i32, i32
  }
  func.func @transform_1(%arg0: i32, %arg1: i32) -> (i32, i32) {
    %c0_i32 = arith.constant 0 : i32
    %c0_i32_0 = arith.constant 0 : i32
    %c0_i32_1 = arith.constant 0 : i32
    return %c0_i32, %c0_i32_0 : i32, i32
  }
  func.func @transform_2(%arg0: i32, %arg1: i32) -> (i32, i32) {
    %c0_i32 = arith.constant 0 : i32
    %c0_i32_0 = arith.constant 0 : i32
    %c0_i32_1 = arith.constant 0 : i32
    return %c0_i32, %c0_i32_0 : i32, i32
  }
  func.func @transform_3(%arg0: i32, %arg1: i32) -> (i32, i32) {
    %c0_i32 = arith.constant 0 : i32
    %c0_i32_0 = arith.constant 0 : i32
    %c0_i32_1 = arith.constant 0 : i32
    return %c0_i32, %c0_i32_0 : i32, i32
  }
  func.func @transform_4(%arg0: i32, %arg1: i32) -> (i32, i32) {
    %c0_i32 = arith.constant 0 : i32
    %c0_i32_0 = arith.constant 0 : i32
    %c0_i32_1 = arith.constant 0 : i32
    return %c0_i32, %c0_i32_0 : i32, i32
  }
  func.func @transform_5(%arg0: i32, %arg1: i32) -> (i32, i32) {
    %c0_i32 = arith.constant 0 : i32
    %c0_i32_0 = arith.constant 0 : i32
    %c0_i32_1 = arith.constant 0 : i32
    return %c0_i32, %c0_i32_0 : i32, i32
  }
  func.func @transform_6(%arg0: i32, %arg1: i32) -> (i32, i32) {
    %c0_i32 = arith.constant 0 : i32
    %c0_i32_0 = arith.constant 0 : i32
    %c0_i32_1 = arith.constant 0 : i32
    return %c0_i32, %c0_i32_0 : i32, i32
  }
  func.func @transform_7(%arg0: i32, %arg1: i32) -> (i32, i32, i32) {
    %c0_i32 = arith.constant 0 : i32
    %c0_i32_0 = arith.constant 0 : i32
    return %arg0, %arg1, %c0_i32 : i32, i32, i32
  }
  func.func @transform_8(%arg0: i32, %arg1: i32) -> (i32, i32, i32) {
    %c0_i32 = arith.constant 0 : i32
    %c0_i32_0 = arith.constant 0 : i32
    return %arg0, %arg1, %c0_i32 : i32, i32, i32
  }
  func.func @transform_9(%arg0: i32, %arg1: i32) -> (i32, i32, i32) {
    %c0_i32 = arith.constant 0 : i32
    %c0_i32_0 = arith.constant 0 : i32
    return %arg0, %arg1, %c0_i32 : i32, i32, i32
  }
}

</mosaic_0001>

<llo_original>
// kernel: tpu_custom_call.1
$region0: #{tpu_custom_call.1}
  #allocation0 [shape = 'u32[]', space=smem, size = 0x4, offset = 0x4, fixed_abs, tag = 'smem constant byte address 0x4 - core index']
  #allocation1 [shape = 'u32[72,128]{1,0:T(1,128)}', space=vmem, size = 0x9000, scoped, tag = 'internal scratch']
  %s0 = inlined_call_operand.hbm [shape: f32[2,8,32], index: 0, kind: input, shape index: {}]
  %s1 = inlined_call_operand.hbm [shape: bf16[32,32], index: 1, kind: input, shape index: {}]
  %s2 = inlined_call_operand.hbm [shape: bf16[32,32], index: 2, kind: input, shape index: {}]
  %s3 = inlined_call_operand.hbm [shape: bf16[32,32], index: 3, kind: input, shape index: {}]
  %s4 = inlined_call_operand.vmem [shape: f32[1,32], index: 4, kind: input, shape index: {}]
  %s5 = inlined_call_operand.vmem [shape: f32[1,32], index: 5, kind: input, shape index: {}]
  %s6 = inlined_call_operand.vmem [shape: f32[1,32], index: 6, kind: input, shape index: {}]
  %s7 = inlined_call_operand.hbm [shape: bf16[2,8,32], index: 7, kind: output, shape index: {0}]
  %s8 = inlined_call_operand.hbm [shape: bf16[2,8,32], index: 8, kind: output, shape index: {1}]
  %s9 = inlined_call_operand.hbm [shape: bf16[2,8,32], index: 9, kind: output, shape index: {2}]
  %10 = xla_tuple %s7, %s8, %s9
  %s11 = sld [smem:[#allocation0]]
  $region93: #{tpu_custom_call.1} parent=0
    _
  %s13 = ssub.s32 1, %s11
  %s14 = scalar_select 0, %s13, %s11
  $region1: #{tpu_custom_call.1} parent=0
    #allocation2 [shape = 'u8[8192]{0}', space=vmem, size = 0x2000, scoped, tag = 'input window, operand 0']
    #allocation3 [shape = 's32[2]{0}', space=sflag, size = 0x8, scoped, tag = 'scoped memory for tpu_custom_call.1']
    #allocation4 [shape = 's32[2]{0}', space=sflag, size = 0x8, scoped, tag = 'scoped memory for tpu_custom_call.1']
    #allocation5 [shape = 'u8[8192]{0}', space=vmem, size = 0x2000, scoped, tag = 'input window, operand 1, single buffered']
    #allocation6 [shape = 's32[1]{0}', space=sflag, size = 0x4, scoped, tag = 'scoped memory for tpu_custom_call.1']
    #allocation7 [shape = 'u8[8192]{0}', space=vmem, size = 0x2000, scoped, tag = 'input window, operand 2, single buffered']
    #allocation8 [shape = 'u8[8192]{0}', space=vmem, size = 0x2000, scoped, tag = 'input window, operand 3, single buffered']
    #allocation9 [shape = 's32[1]{0}', space=sflag, size = 0x4, scoped, tag = 'scoped memory for tpu_custom_call.1']
    #allocation10 [shape = 'u8[4096]{0}', space=vmem, size = 0x1000, scoped, tag = 'output window, operand 0']
    #allocation11 [shape = 'u8[4096]{0}', space=vmem, size = 0x1000, scoped, tag = 'output window, operand 1']
    #allocation12 [shape = 's32[2]{0}', space=sflag, size = 0x8, scoped, tag = 'scoped memory for tpu_custom_call.1']
    #allocation13 [shape = 'u8[4096]{0}', space=vmem, size = 0x1000, scoped, tag = 'output window, operand 2']
    %15 = vsyncpa [#allocation3], 0
    %s16 = scalar_lea.sflag [#allocation3], 1
    %17 = vsyncpa %s16, 0
    %18 = vsyncpa [#allocation6], 0
    %19 = vsyncpa [#allocation9], 0
    %20 = vsyncpa [#allocation4], 0
    %s21 = scalar_lea.sflag [#allocation4], 1
    %22 = vsyncpa %s21, 0
    %23 = vsyncpa [#allocation12], 0
    %s24 = scalar_lea.sflag [#allocation12], 1
    %25 = vsyncpa %s24, 0
    loop: start=0, step=1, limit=4
    $region2: #{tpu_custom_call.1} parent=1 // loop_pre_header
      _
    $region3: #{tpu_custom_call.1} parent=1 // loop_header
      %s27 = sphi 0, %s31
      %p28 = scmp.ge.s32.totalorder %s27, 4
      %s34 = sphi 0, %s46
      %s35 = sphi 0, %s42
      %s36 = sphi 0, %s34
      %s37 = sphi 0, %s35
      %s38 = sphi 0, %s36
      %s39 = sphi 0, %s37
      %s51 = sphi 0, %s53
      %s54 = sphi 0, %s51
      %s55 = sphi 0, %s54
      %s71 = sphi 0, %s55
      %s75 = sphi 0, %s75
      %s77 = sphi 0, %s75
      %s78 = sphi 0, %s77
      %s92 = sphi 0, %s78
      %s96 = sphi 0, %s96
      %s98 = sphi 0, %s96
      %s99 = sphi 0, %s98
      %s113 = sphi 0, %s99
      %s117 = sphi 0, %s117
      %s119 = sphi 0, %s117
      %s120 = sphi 0, %s119
      %s134 = sphi 0, %s120
      %s138 = sphi 0, %s138
      %s140 = sphi 0, %s138
      %s141 = sphi 0, %s140
      %s155 = sphi 0, %s141
      %s159 = sphi 0, %s159
      %s161 = sphi 0, %s159
      %s162 = sphi 0, %s161
      %s176 = sphi 0, %s162
      %s180 = sphi 0, %s180
      %s182 = sphi 0, %s180
      %s183 = sphi 0, %s182
      %s197 = sphi 0, %s183
      %s205 = sphi 0, %s207
      %s208 = sphi 0, %s205
      %s209 = sphi 0, %s208
      %s225 = sphi 0, %s209
      %s233 = sphi 0, %s235
      %s236 = sphi 0, %s233
      %s237 = sphi 0, %s236
      %s253 = sphi 0, %s237
      %s261 = sphi 0, %s263
      %s264 = sphi 0, %s261
      %s265 = sphi 0, %s264
      %s281 = sphi 0, %s265
    $region4: #{tpu_custom_call.1} parent=1 // loop_header_branch
      %30 = sbr.rel (%p28) target = $region8
    $region5: #{tpu_custom_call.1} parent=1 // loop_body
      %s32 = ssub.s32 %s27, 1
      %s33 = ssub.s32 %s27, 2
      %s40 = sadd.s32 1, %s35
      %p41 = scmp.ge.s32.totalorder %s40, 1
      %s42 = scalar_select %p41, 0, %s40
      %s43 = sadd.s32 1, %s34
      %s44 = scalar_select %p41, %s43, %s34
      %p45 = scmp.ge.s32.totalorder %s44, 2
      %s46 = scalar_select %p45, 0, %s44
      %s47 = ssub.s32 %s34, %s46
      %s48 = ssub.s32 %s35, %s42
      %s49 = sor.u32 %s47, %s48
      %p50 = scmp.eq.s32.totalorder %s49, 0
      %s52 = sadd.s32 %s51, 1
      %s53 = scalar_select %p50, %s51, %s52
      %p56 = pneg %p50
      %p57 = scmp.eq.s32.totalorder %s27, 1
      %p58 = por %p56, %p57
      %p59 = scmp.ne.s32.totalorder %s51, %s54
      %p60 = scmp.eq.s32.totalorder %s27, 0
      %p61 = por %p59, %p60
      %p62 = scmp.ne.s32.totalorder %s51, %s54
      %p63 = scmp.eq.s32.totalorder %s32, 1
      %p64 = por %p62, %p63
      %p65 = scmp.ne.s32.totalorder %s54, %s55
      %p66 = scmp.eq.s32.totalorder %s32, 0
      %p67 = por %p65, %p66
      %p68 = scmp.ne.s32.totalorder %s54, %s55
      %p69 = scmp.eq.s32.totalorder %s33, 1
      %p70 = por %p68, %p69
      %p72 = scmp.ne.s32.totalorder %s55, %s71
      %p73 = scmp.eq.s32.totalorder %s33, 0
      %p74 = por %p72, %p73
      %s76 = sadd.s32 %s75, 1
      %p79 = scmp.eq.s32.totalorder %s27, 1
      %p80 = scmp.ne.s32.totalorder %s75, %s77
      %p81 = scmp.eq.s32.totalorder %s27, 0
      %p82 = por %p80, %p81
      %p83 = scmp.ne.s32.totalorder %s75, %s77
      %p84 = scmp.eq.s32.totalorder %s32, 1
      %p85 = por %p83, %p84
      %p86 = scmp.ne.s32.totalorder %s77, %s78
      %p87 = scmp.eq.s32.totalorder %s32, 0
      %p88 = por %p86, %p87
      %p89 = scmp.ne.s32.totalorder %s77, %s78
      %p90 = scmp.eq.s32.totalorder %s33, 1
      %p91 = por %p89, %p90
      %p93 = scmp.ne.s32.totalorder %s78, %s92
      %p94 = scmp.eq.s32.totalorder %s33, 0
      %p95 = por %p93, %p94
      %s97 = sadd.s32 %s96, 1
      %p100 = scmp.eq.s32.totalorder %s27, 1
      %p101 = scmp.ne.s32.totalorder %s96, %s98
      %p102 = scmp.eq.s32.totalorder %s27, 0
      %p103 = por %p101, %p102
      %p104 = scmp.ne.s32.totalorder %s96, %s98
      %p105 = scmp.eq.s32.totalorder %s32, 1
      %p106 = por %p104, %p105
      %p107 = scmp.ne.s32.totalorder %s98, %s99
      %p108 = scmp.eq.s32.totalorder %s32, 0
      %p109 = por %p107, %p108
      %p110 = scmp.ne.s32.totalorder %s98, %s99
      %p111 = scmp.eq.s32.totalorder %s33, 1
      %p112 = por %p110, %p111
      %p114 = scmp.ne.s32.totalorder %s99, %s113
      %p115 = scmp.eq.s32.totalorder %s33, 0
      %p116 = por %p114, %p115
      %s118 = sadd.s32 %s117, 1
      %p121 = scmp.eq.s32.totalorder %s27, 1
      %p122 = scmp.ne.s32.totalorder %s117, %s119
      %p123 = scmp.eq.s32.totalorder %s27, 0
      %p124 = por %p122, %p123
      %p125 = scmp.ne.s32.totalorder %s117, %s119
      %p126 = scmp.eq.s32.totalorder %s32, 1
      %p127 = por %p125, %p126
      %p128 = scmp.ne.s32.totalorder %s119, %s120
      %p129 = scmp.eq.s32.totalorder %s32, 0
      %p130 = por %p128, %p129
      %p131 = scmp.ne.s32.totalorder %s119, %s120
      %p132 = scmp.eq.s32.totalorder %s33, 1
      %p133 = por %p131, %p132
      %p135 = scmp.ne.s32.totalorder %s120, %s134
      %p136 = scmp.eq.s32.totalorder %s33, 0
      %p137 = por %p135, %p136
      %s139 = sadd.s32 %s138, 1
      %p142 = scmp.eq.s32.totalorder %s27, 1
      %p143 = scmp.ne.s32.totalorder %s138, %s140
      %p144 = scmp.eq.s32.totalorder %s27, 0
      %p145 = por %p143, %p144
      %p146 = scmp.ne.s32.totalorder %s138, %s140
      %p147 = scmp.eq.s32.totalorder %s32, 1
      %p148 = por %p146, %p147
      %p149 = scmp.ne.s32.totalorder %s140, %s141
      %p150 = scmp.eq.s32.totalorder %s32, 0
      %p151 = por %p149, %p150
      %p152 = scmp.ne.s32.totalorder %s140, %s141
      %p153 = scmp.eq.s32.totalorder %s33, 1
      %p154 = por %p152, %p153
      %p156 = scmp.ne.s32.totalorder %s141, %s155
      %p157 = scmp.eq.s32.totalorder %s33, 0
      %p158 = por %p156, %p157
      %s160 = sadd.s32 %s159, 1
      %p163 = scmp.eq.s32.totalorder %s27, 1
      %p164 = scmp.ne.s32.totalorder %s159, %s161
      %p165 = scmp.eq.s32.totalorder %s27, 0
      %p166 = por %p164, %p165
      %p167 = scmp.ne.s32.totalorder %s159, %s161
      %p168 = scmp.eq.s32.totalorder %s32, 1
      %p169 = por %p167, %p168
      %p170 = scmp.ne.s32.totalorder %s161, %s162
      %p171 = scmp.eq.s32.totalorder %s32, 0
      %p172 = por %p170, %p171
      %p173 = scmp.ne.s32.totalorder %s161, %s162
      %p174 = scmp.eq.s32.totalorder %s33, 1
      %p175 = por %p173, %p174
      %p177 = scmp.ne.s32.totalorder %s162, %s176
      %p178 = scmp.eq.s32.totalorder %s33, 0
      %p179 = por %p177, %p178
      %s181 = sadd.s32 %s180, 1
      %p184 = scmp.eq.s32.totalorder %s27, 1
      %p185 = scmp.ne.s32.totalorder %s180, %s182
      %p186 = scmp.eq.s32.totalorder %s27, 0
      %p187 = por %p185, %p186
      %p188 = scmp.ne.s32.totalorder %s180, %s182
      %p189 = scmp.eq.s32.totalorder %s32, 1
      %p190 = por %p188, %p189
      %p191 = scmp.ne.s32.totalorder %s182, %s183
      %p192 = scmp.eq.s32.totalorder %s32, 0
      %p193 = por %p191, %p192
      %p194 = scmp.ne.s32.totalorder %s182, %s183
      %p195 = scmp.eq.s32.totalorder %s33, 1
      %p196 = por %p194, %p195
      %p198 = scmp.ne.s32.totalorder %s183, %s197
      %p199 = scmp.eq.s32.totalorder %s33, 0
      %p200 = por %p198, %p199
      %s201 = ssub.s32 %s34, %s46
      %s202 = ssub.s32 %s35, %s42
      %s203 = sor.u32 %s201, %s202
      %p204 = scmp.eq.s32.totalorder %s203, 0
      %s206 = sadd.s32 %s205, 1
      %s207 = scalar_select %p204, %s205, %s206
      %p210 = pneg %p204
      %p211 = scmp.eq.s32.totalorder %s27, 1
      %p212 = por %p210, %p211
      %p213 = scmp.ne.s32.totalorder %s205, %s208
      %p214 = scmp.eq.s32.totalorder %s27, 0
      %p215 = por %p213, %p214
      %p216 = scmp.ne.s32.totalorder %s205, %s208
      %p217 = scmp.eq.s32.totalorder %s32, 1
      %p218 = por %p216, %p217
      %p219 = scmp.ne.s32.totalorder %s208, %s209
      %p220 = scmp.eq.s32.totalorder %s32, 0
      %p221 = por %p219, %p220
      %p222 = scmp.ne.s32.totalorder %s208, %s209
      %p223 = scmp.eq.s32.totalorder %s33, 1
      %p224 = por %p222, %p223
      %p226 = scmp.ne.s32.totalorder %s209, %s225
      %p227 = scmp.eq.s32.totalorder %s33, 0
      %p228 = por %p226, %p227
      %s229 = ssub.s32 %s34, %s46
      %s230 = ssub.s32 %s35, %s42
      %s231 = sor.u32 %s229, %s230
      %p232 = scmp.eq.s32.totalorder %s231, 0
      %s234 = sadd.s32 %s233, 1
      %s235 = scalar_select %p232, %s233, %s234
      %p238 = pneg %p232
      %p239 = scmp.eq.s32.totalorder %s27, 1
      %p240 = por %p238, %p239
      %p241 = scmp.ne.s32.totalorder %s233, %s236
      %p242 = scmp.eq.s32.totalorder %s27, 0
      %p243 = por %p241, %p242
      %p244 = scmp.ne.s32.totalorder %s233, %s236
      %p245 = scmp.eq.s32.totalorder %s32, 1
      %p246 = por %p244, %p245
      %p247 = scmp.ne.s32.totalorder %s236, %s237
      %p248 = scmp.eq.s32.totalorder %s32, 0
      %p249 = por %p247, %p248
      %p250 = scmp.ne.s32.totalorder %s236, %s237
      %p251 = scmp.eq.s32.totalorder %s33, 1
      %p252 = por %p250, %p251
      %p254 = scmp.ne.s32.totalorder %s237, %s253
      %p255 = scmp.eq.s32.totalorder %s33, 0
      %p256 = por %p254, %p255
      %s257 = ssub.s32 %s34, %s46
      %s258 = ssub.s32 %s35, %s42
      %s259 = sor.u32 %s257, %s258
      %p260 = scmp.eq.s32.totalorder %s259, 0
      %s262 = sadd.s32 %s261, 1
      %s263 = scalar_select %p260, %s261, %s262
      %p266 = pneg %p260
      %p267 = scmp.eq.s32.totalorder %s27, 1
      %p268 = por %p266, %p267
      %p269 = scmp.ne.s32.totalorder %s261, %s264
      %p270 = scmp.eq.s32.totalorder %s27, 0
      %p271 = por %p269, %p270
      %p272 = scmp.ne.s32.totalorder %s261, %s264
      %p273 = scmp.eq.s32.totalorder %s32, 1
      %p274 = por %p272, %p273
      %p275 = scmp.ne.s32.totalorder %s264, %s265
      %p276 = scmp.eq.s32.totalorder %s32, 0
      %p277 = por %p275, %p276
      %p278 = scmp.ne.s32.totalorder %s264, %s265
      %p279 = scmp.eq.s32.totalorder %s33, 1
      %p280 = por %p278, %p279
      %p282 = scmp.ne.s32.totalorder %s265, %s281
      %p283 = scmp.eq.s32.totalorder %s33, 0
      %p284 = por %p282, %p283
      %p285 = scmp.le.s32.totalorder 1, %s27
      %p286 = scmp.lt.s32.totalorder %s27, 3
      %p287 = pnand %p285, %p286
      %p288 = pneg %p287
      // Predicated region
      $region9: #{tpu_custom_call.1} parent=5 // pred_check
        _
      $region10: #{tpu_custom_call.1} parent=5 // pred_check_branch
        %290 = sbr.rel (%p287) target = $region12
      $region11: #{tpu_custom_call.1} parent=5 // pred_region
        %s291 = ssub.s32 %s27, 1
        // Predicated region
        $region13: #{tpu_custom_call.1} parent=11 // pred_check
          %p292 = pneg %p88
        $region14: #{tpu_custom_call.1} parent=11 // pred_check_branch
          %294 = sbr.rel (%p292) target = $region16
        $region15: #{tpu_custom_call.1} parent=11 // pred_region
          %296 = vsyncadd [#allocation6], 0
          %s297 = sshll.u32 %s1, 4
          %s298 = int_to_ptr.hbm [resolvable:$true] %s297
          %s299 = sshll.u32 [#allocation5], 4
          %s300 = int_to_ptr.vmem [resolvable:$true] %s299
          %305 = dma.hbm_to_vmem [thread:$0]  %s298, 256, %s300, [#allocation6], 64, 64, 4
        $region16: #{tpu_custom_call.1} parent=11 // pred_fallthru
          _
        // Predicated region
        $region17: #{tpu_custom_call.1} parent=11 // pred_check
          %p306 = pneg %p109
        $region18: #{tpu_custom_call.1} parent=11 // pred_check_branch
          %308 = sbr.rel (%p306) target = $region20
        $region19: #{tpu_custom_call.1} parent=11 // pred_region
          %310 = vsyncadd [#allocation6], 0
          %s311 = sshll.u32 %s2, 4
          %s312 = int_to_ptr.hbm [resolvable:$true] %s311
          %s313 = sshll.u32 [#allocation7], 4
          %s314 = int_to_ptr.vmem [resolvable:$true] %s313
          %319 = dma.hbm_to_vmem [thread:$0]  %s312, 256, %s314, [#allocation6], 64, 64, 4
        $region20: #{tpu_custom_call.1} parent=11 // pred_fallthru
          _
        // Predicated region
        $region21: #{tpu_custom_call.1} parent=11 // pred_check
          %p320 = pneg %p130
        $region22: #{tpu_custom_call.1} parent=11 // pred_check_branch
          %322 = sbr.rel (%p320) target = $region24
        $region23: #{tpu_custom_call.1} parent=11 // pred_region
          %324 = vsyncadd [#allocation9], 0
          %s325 = sshll.u32 %s3, 4
          %s326 = int_to_ptr.hbm [resolvable:$true] %s325
          %s327 = sshll.u32 [#allocation8], 4
          %s328 = int_to_ptr.vmem [resolvable:$true] %s327
          %333 = dma.hbm_to_vmem [thread:$0]  %s326, 256, %s328, [#allocation9], 64, 64, 4
        $region24: #{tpu_custom_call.1} parent=11 // pred_fallthru
          _
        // Predicated region
        $region25: #{tpu_custom_call.1} parent=11 // pred_check
          %p334 = pneg %p151
        $region26: #{tpu_custom_call.1} parent=11 // pred_check_branch
          %336 = sbr.rel (%p334) target = $region28
        $region27: #{tpu_custom_call.1} parent=11 // pred_region
          _
        $region28: #{tpu_custom_call.1} parent=11 // pred_fallthru
          _
        // Predicated region
        $region29: #{tpu_custom_call.1} parent=11 // pred_check
          %p337 = pneg %p172
        $region30: #{tpu_custom_call.1} parent=11 // pred_check_branch
          %339 = sbr.rel (%p337) target = $region32
        $region31: #{tpu_custom_call.1} parent=11 // pred_region
          _
        $region32: #{tpu_custom_call.1} parent=11 // pred_fallthru
          _
        // Predicated region
        $region33: #{tpu_custom_call.1} parent=11 // pred_check
          %p340 = pneg %p193
        $region34: #{tpu_custom_call.1} parent=11 // pred_check_branch
          %342 = sbr.rel (%p340) target = $region36
        $region35: #{tpu_custom_call.1} parent=11 // pred_region
          _
        $region36: #{tpu_custom_call.1} parent=11 // pred_fallthru
          _
      $region12: #{tpu_custom_call.1} parent=5 // pred_fallthru
        _
      %p343 = scmp.lt.s32.totalorder %s27, 2
      // Predicated region
      $region37: #{tpu_custom_call.1} parent=5 // pred_check
        %p344 = pneg %p343
      $region38: #{tpu_custom_call.1} parent=5 // pred_check_branch
        %346 = sbr.rel (%p344) target = $region40
      $region39: #{tpu_custom_call.1} parent=5 // pred_region
        // Predicated region
        $region41: #{tpu_custom_call.1} parent=39 // pred_check
          %p347 = pneg %p61
        $region42: #{tpu_custom_call.1} parent=39 // pred_check_branch
          %349 = sbr.rel (%p347) target = $region44
        $region43: #{tpu_custom_call.1} parent=39 // pred_region
          %s350 = sand.u32 %s51, 1
          %s351 = scalar_lea.sflag [#allocation3], %s350
          %s352 = sand.u32 %s51, 1
          %s353 = smul.addr %s352, 8
          %s354 = scalar_lea.vmem [#allocation2], %s353
          %356 = vsyncadd %s351, 0
          %s357 = sadd.s32 %s35, %s34
          %s358 = smul.addr %s357, 8
          %s359 = scalar_lea.hbm %s0, %s358
          %s361 = sshll.u32 %s359, 4
          %s362 = int_to_ptr.hbm [resolvable:$true] %s361
          %s363 = sshll.u32 %s354, 4
          %s364 = int_to_ptr.vmem [resolvable:$true] %s363
          %366 = dma.hbm_to_vmem [thread:$0]  %s362, 128, %s364, %s351
        $region44: #{tpu_custom_call.1} parent=39 // pred_fallthru
          _
      $region40: #{tpu_custom_call.1} parent=5 // pred_fallthru
        _
      %p367 = scmp.le.s32.totalorder 1, %s27
      %p368 = scmp.lt.s32.totalorder %s27, 3
      %p369 = pnand %p367, %p368
      %p370 = pneg %p369
      // Predicated region
      $region45: #{tpu_custom_call.1} parent=5 // pred_check
        _
      $region46: #{tpu_custom_call.1} parent=5 // pred_check_branch
        %372 = sbr.rel (%p369) target = $region48
      $region47: #{tpu_custom_call.1} parent=5 // pred_region
        %s373 = ssub.s32 %s27, 1
        %s374 = sand.u32 %s54, 1
        %s375 = scalar_lea.sflag [#allocation3], %s374
        %s376 = sand.u32 %s54, 1
        %s377 = smul.addr %s376, 8
        %s378 = scalar_lea.vmem [#allocation2], %s377
        // Predicated region
        $region49: #{tpu_custom_call.1} parent=47 // pred_check
          %p379 = pneg %p67
        $region50: #{tpu_custom_call.1} parent=47 // pred_check_branch
          %381 = sbr.rel (%p379) target = $region52
        $region51: #{tpu_custom_call.1} parent=47 // pred_region
          %383 = dma.done %s375, 128
        $region52: #{tpu_custom_call.1} parent=47 // pred_fallthru
          _
        // Predicated region
        $region53: #{tpu_custom_call.1} parent=47 // pred_check
          %p384 = pneg %p88
        $region54: #{tpu_custom_call.1} parent=47 // pred_check_branch
          %386 = sbr.rel (%p384) target = $region56
        $region55: #{tpu_custom_call.1} parent=47 // pred_region
          %388 = dma.done [#allocation6], 256
        $region56: #{tpu_custom_call.1} parent=47 // pred_fallthru
          _
        // Predicated region
        $region57: #{tpu_custom_call.1} parent=47 // pred_check
          %p389 = pneg %p109
        $region58: #{tpu_custom_call.1} parent=47 // pred_check_branch
          %391 = sbr.rel (%p389) target = $region60
        $region59: #{tpu_custom_call.1} parent=47 // pred_region
          %393 = dma.done [#allocation6], 256
        $region60: #{tpu_custom_call.1} parent=47 // pred_fallthru
          _
        // Predicated region
        $region61: #{tpu_custom_call.1} parent=47 // pred_check
          %p394 = pneg %p130
        $region62: #{tpu_custom_call.1} parent=47 // pred_check_branch
          %396 = sbr.rel (%p394) target = $region64
        $region63: #{tpu_custom_call.1} parent=47 // pred_region
          %398 = dma.done [#allocation9], 256
        $region64: #{tpu_custom_call.1} parent=47 // pred_fallthru
          _
        %s399 = sand.u32 %s54, 1
        %s400 = scalar_lea.sflag [#allocation3], %s399
        %s401 = sand.u32 %s54, 1
        %s402 = smul.addr %s401, 8
        %s403 = scalar_lea.vmem [#allocation2], %s402
        %p404 = pneg %p67
        %p405 = pneg %p64
        %p406 = pneg %p88
        %p407 = pneg %p85
        %p408 = pneg %p109
        %p409 = pneg %p106
        %p410 = pneg %p130
        %p411 = pneg %p127
        %p412 = pneg %p151
        %p413 = pneg %p148
        %p414 = pneg %p172
        %p415 = pneg %p169
        %p416 = pneg %p193
        %p417 = pneg %p190
        %p418 = pneg %p221
        %p419 = pneg %p218
        %s420 = sand.u32 %s208, 1
        %s421 = scalar_lea.sflag [#allocation4], %s420
        %s422 = sand.u32 %s208, 1
        %s423 = smul.addr %s422, 4
        %s424 = scalar_lea.vmem [#allocation10], %s423
        %p425 = pneg %p249
        %p426 = pneg %p246
        %s427 = sand.u32 %s32, 1
        %s428 = scalar_lea.sflag [#allocation12], %s427
        %s429 = sand.u32 %s236, 1
        %s430 = smul.addr %s429, 4
        %s431 = scalar_lea.vmem [#allocation11], %s430
        %p432 = pneg %p277
        %p433 = pneg %p274
        %s434 = sand.u32 %s32, 1
        %s435 = scalar_lea.sflag [#allocation12], %s434
        %s436 = sand.u32 %s264, 1
        %s437 = smul.addr %s436, 4
        %s438 = scalar_lea.vmem [#allocation13], %s437
        %v440 = vld [vmem:[%s378] sm:$0xff]
        %v441 = vpack.c.bf16 %v440, %v440
        %v442 = vld [vmem:[#allocation5] sm:$0xf]
        %v443 = vld [vmem:[#allocation5 + $0x4] sm:$0xf]
        %v444 = vld [vmem:[#allocation5 + $0x8] sm:$0xf]
        %v445 = vld [vmem:[#allocation5 + $0xc] sm:$0xf]
        %v446 = vld [vmem:[%s4] sm:$0x1]
        %v448 = vperm.slane %v446, 0
        %v454 = vunpack.c.l.b16 %v442
        %v455 = vunpack.c.l.b16 %v443
        %v456 = vunpack.c.l.b16 %v444
        %v457 = vunpack.c.l.b16 %v445
        %v458 = vpack.c.b16 %v455, %v454
        %v459 = vpack.c.b16 %v457, %v456
        %vm462 = vcmask 261120
        %v464 = vsel %vm462, %v441, 0
        %466 = vmatpush.bf16.msra.mxu0 0
        %467 = vmatpush.bf16.msra.mxu0 0
        %468 = vmatpush.bf16.msra.mxu0 0
        %469 = vmatpush.bf16.msra.mxu0 0
        %470 = vmatpush.bf16.msra.mxu0 0
        %471 = vmatpush.bf16.msra.mxu0 0
        %472 = vmatpush.bf16.msra.mxu0 %v459
        %473 = vmatpush.bf16.msra.mxu0 %v458
        %474 = vmatmul.bf16.gmra.mxu0 %v464
        %v475 = vpop.f32.mrf.mxu0
        %v476 = vadd.f32 %v448, %v475
        %v477 = vpop.f32.mrf.mxu0
        %478 = vdwg.mxu0
        %v479 = vld [vmem:[#allocation7] sm:$0xf]
        %v480 = vld [vmem:[#allocation7 + $0x4] sm:$0xf]
        %v481 = vld [vmem:[#allocation7 + $0x8] sm:$0xf]
        %v482 = vld [vmem:[#allocation7 + $0xc] sm:$0xf]
        %v483 = vld [vmem:[%s5] sm:$0x1]
        %v485 = vperm.slane %v483, 0
        %v491 = vunpack.c.l.b16 %v479
        %v492 = vunpack.c.l.b16 %v480
        %v493 = vunpack.c.l.b16 %v481
        %v494 = vunpack.c.l.b16 %v482
        %v495 = vpack.c.b16 %v492, %v491
        %v496 = vpack.c.b16 %v494, %v493
        %499 = vmatpush.bf16.msra.mxu0 0
        %500 = vmatpush.bf16.msra.mxu0 0
        %501 = vmatpush.bf16.msra.mxu0 0
        %502 = vmatpush.bf16.msra.mxu0 0
        %503 = vmatpush.bf16.msra.mxu0 0
        %504 = vmatpush.bf16.msra.mxu0 0
        %505 = vmatpush.bf16.msra.mxu0 %v496
        %506 = vmatpush.bf16.msra.mxu0 %v495
        %507 = vmatmul.bf16.gmra.mxu0 %v464
        %v508 = vpop.f32.mrf.mxu0
        %v509 = vadd.f32 %v485, %v508
        %v510 = vpop.f32.mrf.mxu0
        %511 = vdwg.mxu0
        %v512 = vld [vmem:[#allocation8] sm:$0xf]
        %v513 = vld [vmem:[#allocation8 + $0x4] sm:$0xf]
        %v514 = vld [vmem:[#allocation8 + $0x8] sm:$0xf]
        %v515 = vld [vmem:[#allocation8 + $0xc] sm:$0xf]
        %v516 = vld [vmem:[%s6] sm:$0x1]
        %v518 = vperm.slane %v516, 0
        %v524 = vunpack.c.l.b16 %v512
        %v525 = vunpack.c.l.b16 %v513
        %v526 = vunpack.c.l.b16 %v514
        %v527 = vunpack.c.l.b16 %v515
        %v528 = vpack.c.b16 %v525, %v524
        %v529 = vpack.c.b16 %v527, %v526
        %532 = vmatpush.bf16.msra.mxu0 0
        %533 = vmatpush.bf16.msra.mxu0 0
        %534 = vmatpush.bf16.msra.mxu0 0
        %535 = vmatpush.bf16.msra.mxu0 0
        %536 = vmatpush.bf16.msra.mxu0 0
        %537 = vmatpush.bf16.msra.mxu0 0
        %538 = vmatpush.bf16.msra.mxu0 %v529
        %539 = vmatpush.bf16.msra.mxu0 %v528
        %540 = vmatmul.bf16.gmra.mxu0 %v464
        %v541 = vpop.f32.mrf.mxu0
        %v542 = vadd.f32 %v518, %v541
        %v543 = vpop.f32.mrf.mxu0
        %544 = vdwg.mxu0
        %v545 = vpack.c.bf16 %v476, %v476
        %vm546 = vcmask 257024
        %547 = vst.msk [vmem:[%s424] sm:$0xf] %vm546, %v545
        %v548 = vpack.c.bf16 %v509, %v509
        %549 = vst.msk [vmem:[%s431] sm:$0xf] %vm546, %v548
        %v550 = vpack.c.bf16 %v542, %v542
        %551 = vst.msk [vmem:[%s438] sm:$0xf] %vm546, %v550
        %s552 = sand.u32 %s208, 1
        %s553 = scalar_lea.sflag [#allocation4], %s552
        %s554 = sand.u32 %s208, 1
        %s555 = smul.addr %s554, 4
        %s556 = scalar_lea.vmem [#allocation10], %s555
        %s557 = sand.u32 %s32, 1
        %s558 = scalar_lea.sflag [#allocation12], %s557
        %s559 = sand.u32 %s236, 1
        %s560 = smul.addr %s559, 4
        %s561 = scalar_lea.vmem [#allocation11], %s560
        %s562 = sand.u32 %s32, 1
        %s563 = scalar_lea.sflag [#allocation12], %s562
        %s564 = sand.u32 %s264, 1
        %s565 = smul.addr %s564, 4
        %s566 = scalar_lea.vmem [#allocation13], %s565
        // Predicated region
        $region65: #{tpu_custom_call.1} parent=47 // pred_check
          %p567 = pneg %p218
        $region66: #{tpu_custom_call.1} parent=47 // pred_check_branch
          %569 = sbr.rel (%p567) target = $region68
        $region67: #{tpu_custom_call.1} parent=47 // pred_region
          %571 = vsyncadd %s553, 0
          %s572 = sadd.s32 %s37, %s36
          %s573 = smul.addr %s572, 4
          %s574 = scalar_lea.hbm %s7, %s573
          %s576 = sshll.u32 %s556, 4
          %s577 = int_to_ptr.vmem [resolvable:$true] %s576
          %s578 = sshll.u32 %s574, 4
          %s579 = int_to_ptr.hbm [resolvable:$true] %s578
          %581 = dma.vmem_to_hbm [thread:$0]  %s577, 64, %s579, %s553
        $region68: #{tpu_custom_call.1} parent=47 // pred_fallthru
          _
        // Predicated region
        $region69: #{tpu_custom_call.1} parent=47 // pred_check
          %p582 = pneg %p246
        $region70: #{tpu_custom_call.1} parent=47 // pred_check_branch
          %584 = sbr.rel (%p582) target = $region72
        $region71: #{tpu_custom_call.1} parent=47 // pred_region
          %586 = vsyncadd %s558, 0
          %s587 = sadd.s32 %s37, %s36
          %s588 = smul.addr %s587, 4
          %s589 = scalar_lea.hbm %s8, %s588
          %s591 = sshll.u32 %s561, 4
          %s592 = int_to_ptr.vmem [resolvable:$true] %s591
          %s593 = sshll.u32 %s589, 4
          %s594 = int_to_ptr.hbm [resolvable:$true] %s593
          %596 = dma.vmem_to_hbm [thread:$0]  %s592, 64, %s594, %s558
        $region72: #{tpu_custom_call.1} parent=47 // pred_fallthru
          _
        // Predicated region
        $region73: #{tpu_custom_call.1} parent=47 // pred_check
          %p597 = pneg %p274
        $region74: #{tpu_custom_call.1} parent=47 // pred_check_branch
          %599 = sbr.rel (%p597) target = $region76
        $region75: #{tpu_custom_call.1} parent=47 // pred_region
          %601 = vsyncadd %s563, 0
          %s602 = sadd.s32 %s37, %s36
          %s603 = smul.addr %s602, 4
          %s604 = scalar_lea.hbm %s9, %s603
          %s606 = sshll.u32 %s566, 4
          %s607 = int_to_ptr.vmem [resolvable:$true] %s606
          %s608 = sshll.u32 %s604, 4
          %s609 = int_to_ptr.hbm [resolvable:$true] %s608
          %611 = dma.vmem_to_hbm [thread:$0]  %s607, 64, %s609, %s563
        $region76: #{tpu_custom_call.1} parent=47 // pred_fallthru
          _
      $region48: #{tpu_custom_call.1} parent=5 // pred_fallthru
        _
      %p612 = scmp.le.s32.totalorder 2, %s27
      // Predicated region
      $region77: #{tpu_custom_call.1} parent=5 // pred_check
        %p613 = pneg %p612
      $region78: #{tpu_custom_call.1} parent=5 // pred_check_branch
        %615 = sbr.rel (%p613) target = $region80
      $region79: #{tpu_custom_call.1} parent=5 // pred_region
        %s616 = ssub.s32 %s27, 2
        // Predicated region
        $region81: #{tpu_custom_call.1} parent=79 // pred_check
          %p617 = pneg %p224
        $region82: #{tpu_custom_call.1} parent=79 // pred_check_branch
          %619 = sbr.rel (%p617) target = $region84
        $region83: #{tpu_custom_call.1} parent=79 // pred_region
          %s620 = sand.u32 %s209, 1
          %s621 = scalar_lea.sflag [#allocation4], %s620
          %s622 = sand.u32 %s209, 1
          %s623 = smul.addr %s622, 4
          %s624 = scalar_lea.vmem [#allocation10], %s623
          %626 = dma.done %s621, 64
        $region84: #{tpu_custom_call.1} parent=79 // pred_fallthru
          _
        // Predicated region
        $region85: #{tpu_custom_call.1} parent=79 // pred_check
          %p627 = pneg %p252
        $region86: #{tpu_custom_call.1} parent=79 // pred_check_branch
          %629 = sbr.rel (%p627) target = $region88
        $region87: #{tpu_custom_call.1} parent=79 // pred_region
          %s630 = sand.u32 %s33, 1
          %s631 = scalar_lea.sflag [#allocation12], %s630
          %s632 = sand.u32 %s237, 1
          %s633 = smul.addr %s632, 4
          %s634 = scalar_lea.vmem [#allocation11], %s633
          %636 = dma.done %s631, 64
        $region88: #{tpu_custom_call.1} parent=79 // pred_fallthru
          _
        // Predicated region
        $region89: #{tpu_custom_call.1} parent=79 // pred_check
          %p637 = pneg %p280
        $region90: #{tpu_custom_call.1} parent=79 // pred_check_branch
          %639 = sbr.rel (%p637) target = $region92
        $region91: #{tpu_custom_call.1} parent=79 // pred_region
          %s640 = sand.u32 %s33, 1
          %s641 = scalar_lea.sflag [#allocation12], %s640
          %s642 = sand.u32 %s265, 1
          %s643 = smul.addr %s642, 4
          %s644 = scalar_lea.vmem [#allocation13], %s643
          %646 = dma.done %s641, 64
        $region92: #{tpu_custom_call.1} parent=79 // pred_fallthru
          _
      $region80: #{tpu_custom_call.1} parent=5 // pred_fallthru
        _
    $region6: #{tpu_custom_call.1} parent=1 // loop_footer
      %s31 = sadd.s32 1, %s27
    $region7: #{tpu_custom_call.1} parent=1 // loop_footer_branch
      %26 = sbr.rel target = $region3
    $region8: #{tpu_custom_call.1} parent=1 // loop_exit
      _
    %647 = vsyncpa [#allocation3], 1
    %s648 = scalar_lea.sflag [#allocation3], 1
    %649 = vsyncpa %s648, 1
    %650 = vsyncpa [#allocation6], 1
    %651 = vsyncpa [#allocation9], 1
    %652 = vsyncpa [#allocation4], 1
    %s653 = scalar_lea.sflag [#allocation4], 1
    %654 = vsyncpa %s653, 1
    %655 = vsyncpa [#allocation12], 1
    %s656 = scalar_lea.sflag [#allocation12], 1
    %657 = vsyncpa %s656, 1

</llo_original>
